<compile_context>
chip_gen: v7x
topology: tpu7x:2x2x1
jax: 0.10.0
libtpu: 0.0.40
codegen_flags: <defaults>
</compile_context>

<pallas_src>
import functools

import jax
import jax.numpy as jnp
from jax import lax
from jax.experimental import pallas as pl
from jax.experimental.pallas import tpu as pltpu


def _round_up(n: int, m: int) -> int:
    return ((n + m - 1) // m) * m


def _memory_bank_kernel(x_ref, memt_ref, o_ref, denom_ref, *,
                        inv_sigma: float, tile_m: int, valid_m: int,
                        m_pad: int, num_m_tiles: int):
    """One (batch tile, M tile) step: L2-normalize rows of x (1/sigma folded in),
    similarity matmul against a (D, tile_m) bank chunk, exp kernel, L1 row-normalize."""
    # F.normalize(x, dim=1) with eps=1e-12, fused with the 1/sigma scale (EUP rsqrt).
    x = x_ref[...].astype(jnp.float32)                              # (tb, D)
    sq = jnp.sum(x * x, axis=1, keepdims=True)                      # (tb, 1)
    scale = lax.rsqrt(jnp.maximum(sq, 1e-24)) * inv_sigma
    xs = x * scale                                                  # already / sigma

    mem = memt_ref[...]                                             # (D, tile_m)
    if mem.dtype != jnp.float32:
        xs = xs.astype(mem.dtype)                                   # bf16 MXU path (opt-in)

    # similarities / sigma on the MXU (M on the lane axis), exp on the EUP.
    kw = jnp.exp(jnp.dot(xs, mem, preferred_element_type=jnp.float32))   # (tb, tile_m)

    if num_m_tiles == 1:
        # ---- fused single-pass path: bank resident, no write-then-reread ----
        if valid_m != m_pad:
            cols = lax.broadcasted_iota(jnp.int32, kw.shape, 1)
            kw = jnp.where(cols < valid_m, kw, 0.0)   # keep padded cols out of the L1 sum
        denom = jnp.sum(kw, axis=1, keepdims=True)                  # (tb, 1)
        inv = pl.reciprocal(jnp.maximum(denom, 1e-12), approx=False)
        o_ref[...] = (kw * inv).astype(o_ref.dtype)
    else:
        # ---- streaming-bank path: (tb, M_pad) output block resident across the M axis ----
        j = pl.program_id(1)
        col0 = pl.multiple_of(j * tile_m, 128)
        if valid_m != m_pad:
            cols = col0 + lax.broadcasted_iota(jnp.int32, kw.shape, 1)
            kw = jnp.where(cols < valid_m, kw, 0.0)

        @pl.when(j == 0)
        def _():
            denom_ref[...] = jnp.zeros_like(denom_ref)
        denom_ref[...] += jnp.sum(kw, axis=1, keepdims=True)        # (tb, 1)

        # write exp(sims) straight into the resident output block (no separate kw buffer)
        o_ref[:, pl.ds(col0, tile_m)] = kw.astype(o_ref.dtype)

        @pl.when(j == num_m_tiles - 1)
        def _():
            # F.normalize(kw, p=1, dim=1): in-place rescale of the resident block
            inv = pl.reciprocal(jnp.maximum(denom_ref[...], 1e-12), approx=False)
            o_ref[...] = (o_ref[...].astype(jnp.float32) * inv).astype(o_ref.dtype)


def prepare_memory_bank(memory: jax.Array, *, bank_dtype=None):
    """One-time bank preparation -- hoist this to bank-update time (the bank is static
    between updates): transpose to (D, M_pad), pad M to a multiple of 128 so the output
    stays lane-dense, optional cast (bf16 halves bank DMA/VMEM, costs accuracy)."""
    M, D = memory.shape
    m_pad = _round_up(M, 128)
    mem_t = memory.T                                                # (D, M)
    if m_pad != M:
        mem_t = jnp.pad(mem_t, ((0, 0), (0, m_pad - M)))
    if bank_dtype is not None:
        mem_t = mem_t.astype(bank_dtype)
    return mem_t, M


def memory_bank_mapper_forward(x: jax.Array, mem_t: jax.Array, memory_size: int,
                               sigma: float = 1.0, *, tile_b: int | None = None,
                               tile_m: int | None = None, out_dtype=None) -> jax.Array:
    """x: (B, D). mem_t: (D, M_pad) from prepare_memory_bank (bank rows assumed
    L2-normalized, as in the module's __init__). Returns (B, memory_size) in out_dtype
    (default: x.dtype; pass jnp.bfloat16 to halve HBM writeback on large B*M)."""
    B, D = x.shape
    D2, m_pad = mem_t.shape
    assert D == D2 and m_pad % 128 == 0 and memory_size <= m_pad

    out_dtype = x.dtype if out_dtype is None else jnp.dtype(out_dtype)
    out_isz = jnp.dtype(out_dtype).itemsize
    x_isz = x.dtype.itemsize
    bank_isz = mem_t.dtype.itemsize

    # Generation-aware VMEM budget (v5e/v6e: 128 MiB physical, v7x: 64 MiB).
    try:
        vmem_cap = int(pltpu.get_tpu_info().vmem_capacity_bytes)
    except Exception:
        vmem_cap = 64 << 20                                       # conservative fallback
    budget = int(vmem_cap * 0.85)

    def footprint(tb, tm):
        # 1x invariant bank (Buffered(1)) when resident, else 2x streamed bank chunk;
        # 2x x tile, 2x output block, plus the live f32 exp(sims) tile.
        bank = D * m_pad * bank_isz if tm == m_pad else 2 * D * tm * bank_isz
        return (bank + 2 * tb * D * x_isz
                + 2 * tb * m_pad * out_isz
                + tb * tm * 4)

    # ---- tile selection -----------------------------------------------------------
    b8 = _round_up(B, 8)
    if tile_m is None:
        tile_m = m_pad
    if tile_b is None:
        tile_b = min(b8, 256)
        while tile_b > 8 and footprint(tile_b, tile_m) > budget:
            tile_b = max(8, tile_b // 2)
        # prefer >= 2 batch tiles so the "parallel" axis can feed both v7x TensorCores
        if tile_b == b8 and b8 >= 16:
            tile_b = _round_up(b8 // 2, 8)
    # if the resident bank still does not fit, stream it over M chunks
    while footprint(tile_b, tile_m) > budget and tile_m > 128:
        tile_m = max(128, _round_up(tile_m // 2, 128))

    B_pad = _round_up(B, tile_b)
    if B_pad != B:
        x = jnp.pad(x, ((0, B_pad - B), (0, 0)))   # zero rows normalize harmlessly

    n_b = B_pad // tile_b
    n_m = m_pad // tile_m

    needed = footprint(tile_b, tile_m) + (2 << 20)
    vmem_limit = None if needed <= (16 << 20) else int(min(needed, budget))

    kernel = functools.partial(
        _memory_bank_kernel,
        inv_sigma=float(1.0 / sigma), tile_m=tile_m,
        valid_m=int(memory_size), m_pad=int(m_pad), num_m_tiles=int(n_m))

    # The invariant bank (single M step) never needs double buffering.
    if n_m == 1:
        bank_spec = pl.BlockSpec((D, tile_m), lambda i, j: (0, j),
                                 pipeline_mode=pl.Buffered(1))
    else:
        bank_spec = pl.BlockSpec((D, tile_m), lambda i, j: (0, j))

    cost = pl.CostEstimate(
        flops=2 * B_pad * m_pad * D,
        transcendentals=B_pad * m_pad,
        bytes_accessed=(x_isz * B_pad * D
                        + bank_isz * D * m_pad * (n_b if n_m > 1 else 1)
                        + out_isz * B_pad * m_pad),
    )

    out = pl.pallas_call(
        kernel,
        out_shape=jax.ShapeDtypeStruct((B_pad, m_pad), out_dtype),
        grid_spec=pltpu.PrefetchScalarGridSpec(
            num_scalar_prefetch=0,
            grid=(n_b, n_m),
            in_specs=[
                pl.BlockSpec((tile_b, D), lambda i, j: (i, 0)),   # batch tile of x
                bank_spec,                                        # (D, tile_m) bank chunk
            ],
            out_specs=pl.BlockSpec((tile_b, m_pad), lambda i, j: (i, 0)),
            scratch_shapes=[pltpu.VMEM((tile_b, 1), jnp.float32)],  # L1 denominator
        ),
        compiler_params=pltpu.CompilerParams(
            dimension_semantics=("parallel", "arbitrary"),
            vmem_limit_bytes=vmem_limit,
        ),
        cost_estimate=cost,
    )(x, mem_t)

    if B_pad != B or m_pad != memory_size:
        out = out[:B, :memory_size]
    return out


def memory_bank_mapper(x: jax.Array, memory: jax.Array, sigma: float = 1.0, **kwargs):
    """Convenience path matching the module's forward signature. Prefer hoisting
    prepare_memory_bank() to bank-update time instead of paying the transpose per call."""
    mem_t, M = prepare_memory_bank(memory)
    return memory_bank_mapper_forward(x, mem_t, M, sigma, **kwargs)


def reference_forward(x, memory, sigma):
    """Pure-JAX reference mirroring the PyTorch forward."""
    l2 = jnp.sqrt(jnp.sum(x * x, axis=1, keepdims=True))
    x_n = x / jnp.maximum(l2, 1e-12)
    kw = jnp.exp((x_n @ memory.T) / sigma)
    denom = jnp.sum(jnp.abs(kw), axis=1, keepdims=True)
    return kw / jnp.maximum(denom, 1e-12)


if __name__ == "__main__":
    key = jax.random.PRNGKey(0)
    k_mem, k_x, k_mem2, k_x2 = jax.random.split(key, 4)

    # TODO(synk): MemoryBankMapper.update() (training-time bank mutation with a moving
    # pointer) is stateful host/JAX-side bookkeeping and is not part of the forward kernel.

    # --- case 1: default path (resident bank, single M step, batch split into 2 tiles) ---
    feature_dim, memory_size, batch, sigma = 64, 256, 12, 0.5
    memory = jax.random.normal(k_mem, (memory_size, feature_dim), dtype=jnp.float32)
    memory = memory / jnp.maximum(
        jnp.sqrt(jnp.sum(memory * memory, axis=1, keepdims=True)), 1e-12)
    x = jax.random.normal(k_x, (batch, feature_dim), dtype=jnp.float32)

    mem_t, M = prepare_memory_bank(memory)          # hoisted one-time bank preparation
    out = jax.block_until_ready(memory_bank_mapper_forward(x, mem_t, M, sigma))
    ref = reference_forward(x, memory, sigma)
    assert out.shape == (batch, memory_size)
    assert jnp.allclose(out, ref, atol=1e-5, rtol=1e-5), "f32 path mismatch vs reference"
    assert jnp.allclose(jnp.sum(out, axis=1), jnp.ones((batch,)), atol=1e-4)

    # --- case 2: bf16 output (halves HBM writeback; looser tolerance) ---
    out_bf16 = jax.block_until_ready(
        memory_bank_mapper_forward(x, mem_t, M, sigma, out_dtype=jnp.bfloat16))
    assert out_bf16.dtype == jnp.bfloat16
    assert jnp.allclose(out_bf16.astype(jnp.float32), ref, atol=1e-3, rtol=2e-2), \
        "bf16 path mismatch vs reference"

    # --- case 3: ragged M + forced bank streaming over M (v7x large-bank path) ---
    fd2, ms2, b2, sigma2 = 32, 200, 5, 1.3
    memory2 = jax.random.normal(k_mem2, (ms2, fd2), dtype=jnp.float32)
    memory2 = memory2 / jnp.maximum(
        jnp.sqrt(jnp.sum(memory2 * memory2, axis=1, keepdims=True)), 1e-12)
    x2 = jax.random.normal(k_x2, (b2, fd2), dtype=jnp.float32)
    mem_t2, M2 = prepare_memory_bank(memory2)       # pads M: 200 -> 256 (lane-dense)
    out2 = jax.block_until_ready(
        memory_bank_mapper_forward(x2, mem_t2, M2, sigma2, tile_b=8, tile_m=128))
    ref2 = reference_forward(x2, memory2, sigma2)
    assert out2.shape == (b2, ms2)
    assert jnp.allclose(out2, ref2, atol=1e-5, rtol=1e-5), "streamed path mismatch"
    assert jnp.allclose(jnp.sum(out2, axis=1), jnp.ones((b2,)), atol=1e-4)

    print("KERNEL_OK")
</pallas_src>

<mosaic_0001>
module attributes {stable_mosaic.version = 11 : i64} {
  func.func @_memory_bank_kernel(%arg0: i32, %arg1: i32, %arg2: memref<8x64xf32, #tpu.memory_space<vmem>>, %arg3: memref<64x256xf32, #tpu.memory_space<vmem>>, %arg4: memref<8x256xf32, #tpu.memory_space<vmem>>, %arg5: memref<8x1xf32, #tpu.memory_space<vmem>>) attributes {dimension_semantics = [#tpu.dimension_semantics<parallel>, #tpu.dimension_semantics<arbitrary>], iteration_bounds = array<i64: 2, 1>, scalar_prefetch = 0 : i64, scratch_operands = 1 : i64, tpu.core_type = #tpu.core_type<tc>, window_params = [{transform_indices = @transform_0, window_bounds = array<i64: 8, 64>}, {pipeline_mode = #tpu.pipeline_mode<synchronous>, transform_indices = @transform_1, window_bounds = array<i64: 64, 256>}, {transform_indices = @transform_2, window_bounds = array<i64: 8, 256>}]} {
    %c0 = arith.constant 0 : index
    %c0_0 = arith.constant 0 : index
    %0 = vector.load %arg2[%c0, %c0_0] : memref<8x64xf32, #tpu.memory_space<vmem>>, vector<8x64xf32>
    %1 = arith.mulf %0, %0 : vector<8x64xf32>
    %cst = arith.constant dense<0.000000e+00> : vector<8xf32>
    %2 = vector.multi_reduction <add>, %1, %cst [1] : vector<8x64xf32> to vector<8xf32>
    %3 = vector.shape_cast %2 : vector<8xf32> to vector<8x1xf32>
    %cst_1 = arith.constant 1.000000e-24 : f32
    %4 = vector.broadcast %cst_1 : f32 to vector<8x1xf32>
    %5 = arith.maximumf %3, %4 : vector<8x1xf32>
    %6 = math.rsqrt %5 : vector<8x1xf32>
    %cst_2 = arith.constant 2.000000e+00 : f32
    %7 = vector.broadcast %cst_2 : f32 to vector<8x1xf32>
    %8 = arith.mulf %6, %7 : vector<8x1xf32>
    %9 = vector.broadcast %8 : vector<8x1xf32> to vector<8x64xf32>
    %10 = arith.mulf %0, %9 : vector<8x64xf32>
    %c0_3 = arith.constant 0 : index
    %c0_4 = arith.constant 0 : index
    %11 = vector.load %arg3[%c0_3, %c0_4] : memref<64x256xf32, #tpu.memory_space<vmem>>, vector<64x256xf32>
    %cst_5 = arith.constant dense<0.000000e+00> : vector<8x256xf32>
    %12 = tpu.matmul %10, %11, %cst_5 {dimension_numbers = #tpu.dot_dimension_numbers<[1], [0], [0], [1], [0, 0, 1, 1], [], []>} : vector<8x64xf32>, vector<64x256xf32>, vector<8x256xf32> -> vector<8x256xf32>
    %13 = math.exp %12 : vector<8x256xf32>
    %cst_6 = arith.constant dense<0.000000e+00> : vector<8xf32>
    %14 = vector.multi_reduction <add>, %13, %cst_6 [1] : vector<8x256xf32> to vector<8xf32>
    %15 = vector.shape_cast %14 : vector<8xf32> to vector<8x1xf32>
    %cst_7 = arith.constant 9.99999996E-13 : f32
    %16 = vector.broadcast %cst_7 : f32 to vector<8x1xf32>
    %17 = arith.maximumf %15, %16 : vector<8x1xf32>
    %18 = tpu.reciprocal %17 : vector<8x1xf32> -> vector<8x1xf32>
    %19 = vector.broadcast %18 : vector<8x1xf32> to vector<8x256xf32>
    %20 = arith.mulf %13, %19 : vector<8x256xf32>
    %c0_8 = arith.constant 0 : index
    %c0_9 = arith.constant 0 : index
    %21 = vector.load %arg4[%c0_8, %c0_9] : memref<8x256xf32, #tpu.memory_space<vmem>>, vector<8x256xf32>
    tpu.vector_store %arg4[%c0_8, %c0_9], %20 {strides = array<i32>} : memref<8x256xf32, #tpu.memory_space<vmem>>, vector<8x256xf32>,
    return
  }
  func.func @transform_0(%arg0: i32, %arg1: i32) -> (i32, i32) {
    %c0_i32 = arith.constant 0 : i32
    %c0_i32_0 = arith.constant 0 : i32
    return %arg0, %c0_i32 : i32, i32
  }
  func.func @transform_1(%arg0: i32, %arg1: i32) -> (i32, i32) {
    %c0_i32 = arith.constant 0 : i32
    %c0_i32_0 = arith.constant 0 : i32
    return %c0_i32, %arg1 : i32, i32
  }
  func.func @transform_2(%arg0: i32, %arg1: i32) -> (i32, i32) {
    %c0_i32 = arith.constant 0 : i32
    %c0_i32_0 = arith.constant 0 : i32
    return %arg0, %c0_i32 : i32, i32
  }
}

</mosaic_0001>

<llo_original>
// kernel: tpu_custom_call.1
$region0: #{tpu_custom_call.1}
  #allocation0 [shape = 'u32[]', space=smem, size = 0x4, offset = 0x4, fixed_abs, tag = 'smem constant byte address 0x4 - core index']
  #allocation1 [shape = 'u32[144,128]{1,0:T(1,128)}', space=vmem, size = 0x12000, scoped, tag = 'internal scratch']
  #allocation2 [shape = 'f32[8,1]{1,0:T(8,128)}', space=vmem, size = 0x1000, scoped, tag = 'scratch operand']
  %s0 = inlined_call_operand.hbm [shape: f32[16,64], index: 0, kind: input, shape index: {}]
  %s1 = inlined_call_operand.hbm [shape: f32[64,256], index: 1, kind: input, shape index: {}]
  %s2 = inlined_call_operand.hbm [shape: f32[16,256], index: 2, kind: output, shape index: {}]
  %s3 = sld [smem:[#allocation0]]
  $region49: #{tpu_custom_call.1} parent=0
    _
  %s5 = ssub.s32 1, %s3
  %s6 = scalar_select 0, %s5, %s3
  $region1: #{tpu_custom_call.1} parent=0
    #allocation3 [shape = 'u8[8192]{0}', space=vmem, size = 0x2000, scoped, tag = 'input window, operand 0']
    #allocation4 [shape = 's32[2]{0}', space=sflag, size = 0x8, scoped, tag = 'scoped memory for tpu_custom_call.1']
    #allocation5 [shape = 's32[2]{0}', space=sflag, size = 0x8, scoped, tag = 'scoped memory for tpu_custom_call.1']
    #allocation6 [shape = 'u8[65536]{0}', space=vmem, size = 0x10000, scoped, tag = 'input window, operand 1, single buffered']
    #allocation7 [shape = 's32[1]{0}', space=sflag, size = 0x4, scoped, tag = 'scoped memory for tpu_custom_call.1']
    #allocation8 [shape = 'u8[16384]{0}', space=vmem, size = 0x4000, scoped, tag = 'output window, operand 0']
    %7 = vsyncpa [#allocation4], 0
    %s8 = scalar_lea.sflag [#allocation4], 1
    %9 = vsyncpa %s8, 0
    %10 = vsyncpa [#allocation7], 0
    %11 = vsyncpa [#allocation5], 0
    %s12 = scalar_lea.sflag [#allocation5], 1
    %13 = vsyncpa %s12, 0
    loop: start=0, step=1, limit=4
    $region2: #{tpu_custom_call.1} parent=1 // loop_pre_header
      _
    $region3: #{tpu_custom_call.1} parent=1 // loop_header
      %s15 = sphi 0, %s19
      %p16 = scmp.ge.s32.totalorder %s15, 4
      %s22 = sphi 0, %s34
      %s23 = sphi 0, %s30
      %s24 = sphi 0, %s22
      %s25 = sphi 0, %s23
      %s26 = sphi 0, %s24
      %s27 = sphi 0, %s25
      %s37 = sphi 0, %s39
      %s40 = sphi 0, %s37
      %s41 = sphi 0, %s40
      %s57 = sphi 0, %s41
      %s63 = sphi 0, %s65
      %s66 = sphi 0, %s63
      %s67 = sphi 0, %s66
      %s83 = sphi 0, %s67
      %s89 = sphi 0, %s91
      %s92 = sphi 0, %s89
      %s93 = sphi 0, %s92
      %s109 = sphi 0, %s93
    $region4: #{tpu_custom_call.1} parent=1 // loop_header_branch
      %18 = sbr.rel (%p16) target = $region8
    $region5: #{tpu_custom_call.1} parent=1 // loop_body
      %s20 = ssub.s32 %s15, 1
      %s21 = ssub.s32 %s15, 2
      %s28 = sadd.s32 1, %s23
      %p29 = scmp.ge.s32.totalorder %s28, 1
      %s30 = scalar_select %p29, 0, %s28
      %s31 = sadd.s32 1, %s22
      %s32 = scalar_select %p29, %s31, %s22
      %p33 = scmp.ge.s32.totalorder %s32, 2
      %s34 = scalar_select %p33, 0, %s32
      %s35 = ssub.s32 %s22, %s34
      %p36 = scmp.eq.s32.totalorder %s35, 0
      %s38 = sadd.s32 %s37, 1
      %s39 = scalar_select %p36, %s37, %s38
      %p42 = pneg %p36
      %p43 = scmp.eq.s32.totalorder %s15, 1
      %p44 = por %p42, %p43
      %p45 = scmp.ne.s32.totalorder %s37, %s40
      %p46 = scmp.eq.s32.totalorder %s15, 0
      %p47 = por %p45, %p46
      %p48 = scmp.ne.s32.totalorder %s37, %s40
      %p49 = scmp.eq.s32.totalorder %s20, 1
      %p50 = por %p48, %p49
      %p51 = scmp.ne.s32.totalorder %s40, %s41
      %p52 = scmp.eq.s32.totalorder %s20, 0
      %p53 = por %p51, %p52
      %p54 = scmp.ne.s32.totalorder %s40, %s41
      %p55 = scmp.eq.s32.totalorder %s21, 1
      %p56 = por %p54, %p55
      %p58 = scmp.ne.s32.totalorder %s41, %s57
      %p59 = scmp.eq.s32.totalorder %s21, 0
      %p60 = por %p58, %p59
      %s61 = ssub.s32 %s23, %s30
      %p62 = scmp.eq.s32.totalorder %s61, 0
      %s64 = sadd.s32 %s63, 1
      %s65 = scalar_select %p62, %s63, %s64
      %p68 = pneg %p62
      %p69 = scmp.eq.s32.totalorder %s15, 1
      %p70 = por %p68, %p69
      %p71 = scmp.ne.s32.totalorder %s63, %s66
      %p72 = scmp.eq.s32.totalorder %s15, 0
      %p73 = por %p71, %p72
      %p74 = scmp.ne.s32.totalorder %s63, %s66
      %p75 = scmp.eq.s32.totalorder %s20, 1
      %p76 = por %p74, %p75
      %p77 = scmp.ne.s32.totalorder %s66, %s67
      %p78 = scmp.eq.s32.totalorder %s20, 0
      %p79 = por %p77, %p78
      %p80 = scmp.ne.s32.totalorder %s66, %s67
      %p81 = scmp.eq.s32.totalorder %s21, 1
      %p82 = por %p80, %p81
      %p84 = scmp.ne.s32.totalorder %s67, %s83
      %p85 = scmp.eq.s32.totalorder %s21, 0
      %p86 = por %p84, %p85
      %s87 = ssub.s32 %s22, %s34
      %p88 = scmp.eq.s32.totalorder %s87, 0
      %s90 = sadd.s32 %s89, 1
      %s91 = scalar_select %p88, %s89, %s90
      %p94 = pneg %p88
      %p95 = scmp.eq.s32.totalorder %s15, 1
      %p96 = por %p94, %p95
      %p97 = scmp.ne.s32.totalorder %s89, %s92
      %p98 = scmp.eq.s32.totalorder %s15, 0
      %p99 = por %p97, %p98
      %p100 = scmp.ne.s32.totalorder %s89, %s92
      %p101 = scmp.eq.s32.totalorder %s20, 1
      %p102 = por %p100, %p101
      %p103 = scmp.ne.s32.totalorder %s92, %s93
      %p104 = scmp.eq.s32.totalorder %s20, 0
      %p105 = por %p103, %p104
      %p106 = scmp.ne.s32.totalorder %s92, %s93
      %p107 = scmp.eq.s32.totalorder %s21, 1
      %p108 = por %p106, %p107
      %p110 = scmp.ne.s32.totalorder %s93, %s109
      %p111 = scmp.eq.s32.totalorder %s21, 0
      %p112 = por %p110, %p111
      %p113 = scmp.le.s32.totalorder 1, %s15
      %p114 = scmp.lt.s32.totalorder %s15, 3
      %p115 = pnand %p113, %p114
      %p116 = pneg %p115
      // Predicated region
      $region9: #{tpu_custom_call.1} parent=5 // pred_check
        _
      $region10: #{tpu_custom_call.1} parent=5 // pred_check_branch
        %118 = sbr.rel (%p115) target = $region12
      $region11: #{tpu_custom_call.1} parent=5 // pred_region
        %s119 = ssub.s32 %s15, 1
        // Predicated region
        $region13: #{tpu_custom_call.1} parent=11 // pred_check
          %p120 = pneg %p79
        $region14: #{tpu_custom_call.1} parent=11 // pred_check_branch
          %122 = sbr.rel (%p120) target = $region16
        $region15: #{tpu_custom_call.1} parent=11 // pred_region
          %s123 = smul.u32 2, %s25
          %s125 = ssub.s32 2048, 2048
          %126 = vsyncadd [#allocation7], %s125
          %s127 = smul.addr %s123, 128
          %s128 = scalar_lea.hbm %s1, %s127
          %s129 = sshll.u32 [#allocation6], 4
          %s130 = int_to_ptr.vmem [resolvable:$true] %s129
          %135 = dma.hbm_to_vmem [thread:$0]  %s128, 2048, %s130, [#allocation7], 256, 256, 16
        $region16: #{tpu_custom_call.1} parent=11 // pred_fallthru
          _
      $region12: #{tpu_custom_call.1} parent=5 // pred_fallthru
        _
      %p136 = scmp.lt.s32.totalorder %s15, 2
      // Predicated region
      $region17: #{tpu_custom_call.1} parent=5 // pred_check
        %p137 = pneg %p136
      $region18: #{tpu_custom_call.1} parent=5 // pred_check_branch
        %139 = sbr.rel (%p137) target = $region20
      $region19: #{tpu_custom_call.1} parent=5 // pred_region
        // Predicated region
        $region21: #{tpu_custom_call.1} parent=19 // pred_check
          %p140 = pneg %p47
        $region22: #{tpu_custom_call.1} parent=19 // pred_check_branch
          %142 = sbr.rel (%p140) target = $region24
        $region23: #{tpu_custom_call.1} parent=19 // pred_region
          %s143 = sand.u32 %s37, 1
          %s144 = scalar_lea.sflag [#allocation4], %s143
          %s145 = sand.u32 %s37, 1
          %s146 = smul.addr %s145, 8
          %s147 = scalar_lea.vmem [#allocation3], %s146
          %s149 = ssub.s32 128, 128
          %150 = vsyncadd %s144, %s149
          %s151 = smul.addr %s22, 128
          %s152 = scalar_lea.hbm %s0, %s151
          %s154 = sshll.u32 %s147, 4
          %s155 = int_to_ptr.vmem [resolvable:$true] %s154
          %157 = dma.hbm_to_vmem [thread:$0]  %s152, 128, %s155, %s144
        $region24: #{tpu_custom_call.1} parent=19 // pred_fallthru
          _
      $region20: #{tpu_custom_call.1} parent=5 // pred_fallthru
        _
      %p158 = scmp.le.s32.totalorder 1, %s15
      %p159 = scmp.lt.s32.totalorder %s15, 3
      %p160 = pnand %p158, %p159
      %p161 = pneg %p160
      // Predicated region
      $region25: #{tpu_custom_call.1} parent=5 // pred_check
        _
      $region26: #{tpu_custom_call.1} parent=5 // pred_check_branch
        %163 = sbr.rel (%p160) target = $region28
      $region27: #{tpu_custom_call.1} parent=5 // pred_region
        %s164 = ssub.s32 %s15, 1
        %s165 = sand.u32 %s40, 1
        %s166 = scalar_lea.sflag [#allocation4], %s165
        %s167 = sand.u32 %s40, 1
        %s168 = smul.addr %s167, 8
        %s169 = scalar_lea.vmem [#allocation3], %s168
        // Predicated region
        $region29: #{tpu_custom_call.1} parent=27 // pred_check
          %p170 = pneg %p53
        $region30: #{tpu_custom_call.1} parent=27 // pred_check_branch
          %172 = sbr.rel (%p170) target = $region32
        $region31: #{tpu_custom_call.1} parent=27 // pred_region
          %173 = dma.done %s166, 128
        $region32: #{tpu_custom_call.1} parent=27 // pred_fallthru
          _
        // Predicated region
        $region33: #{tpu_custom_call.1} parent=27 // pred_check
          %p174 = pneg %p79
        $region34: #{tpu_custom_call.1} parent=27 // pred_check_branch
          %176 = sbr.rel (%p174) target = $region36
        $region35: #{tpu_custom_call.1} parent=27 // pred_region
          %177 = dma.done [#allocation7], 2048
        $region36: #{tpu_custom_call.1} parent=27 // pred_fallthru
          _
        %s178 = sand.u32 %s40, 1
        %s179 = scalar_lea.sflag [#allocation4], %s178
        %s180 = sand.u32 %s40, 1
        %s181 = smul.addr %s180, 8
        %s182 = scalar_lea.vmem [#allocation3], %s181
        %p183 = pneg %p53
        %p184 = pneg %p50
        %p185 = pneg %p79
        %p186 = pneg %p76
        %p187 = pneg %p105
        %p188 = pneg %p102
        %s189 = sand.u32 %s92, 1
        %s190 = scalar_lea.sflag [#allocation5], %s189
        %s191 = sand.u32 %s92, 1
        %s192 = smul.addr %s191, 16
        %s193 = scalar_lea.vmem [#allocation8], %s192
        %s194 = smul.u32 2, %s25
        %v195 = vld [vmem:[%s169] sm:$0xff]
        %v196 = vmul.f32 %v195, %v195
        %vm197 = vcmask 523264
        %v198 = vsel %vm197, %v196, 0.0
        %199 = vadd.xlane.f32.xlu0 %v198
        %v200 = vpop.xlane.xlu0 %199
        %v201 = vmax.f32 %v200, 1e-24
        %v202 = vrsqrt.pop %v201
        %v203 = vmul.f32 %v202, 2.0
        %v204 = vmul.f32 %v195, %v203
        %v205 = vld [vmem:[#allocation6] sm:$0xff]
        %v206 = vld [vmem:[#allocation6 + $0x8] sm:$0xff]
        %v207 = vld [vmem:[#allocation6 + $0x10] sm:$0xff]
        %v208 = vld [vmem:[#allocation6 + $0x18] sm:$0xff]
        %v209 = vld [vmem:[#allocation6 + $0x20] sm:$0xff]
        %v210 = vld [vmem:[#allocation6 + $0x28] sm:$0xff]
        %v211 = vld [vmem:[#allocation6 + $0x30] sm:$0xff]
        %v212 = vld [vmem:[#allocation6 + $0x38] sm:$0xff]
        %v213 = vld [vmem:[#allocation6 + $0x40] sm:$0xff]
        %v214 = vld [vmem:[#allocation6 + $0x48] sm:$0xff]
        %v215 = vld [vmem:[#allocation6 + $0x50] sm:$0xff]
        %v216 = vld [vmem:[#allocation6 + $0x58] sm:$0xff]
        %v217 = vld [vmem:[#allocation6 + $0x60] sm:$0xff]
        %v218 = vld [vmem:[#allocation6 + $0x68] sm:$0xff]
        %v219 = vld [vmem:[#allocation6 + $0x70] sm:$0xff]
        %v220 = vld [vmem:[#allocation6 + $0x78] sm:$0xff]
        %v222 = vsel %vm197, %v204, 0
        %224 = vmatprep.subr.mxu0 %v206
        %225 = vmatpush1.msra.mxu0 %v205
        %226 = vmatprep.subr.mxu0 %v208
        %227 = vmatpush1.msra.mxu0 %v207
        %228 = vmatprep.subr.mxu0 %v210
        %229 = vmatpush1.msra.mxu0 %v209
        %230 = vmatprep.subr.mxu0 %v212
        %231 = vmatpush1.msra.mxu0 %v211
        %232 = vmatprep.subr.mxu0 %v214
        %233 = vmatpush1.msra.mxu0 %v213
        %234 = vmatprep.subr.mxu0 %v216
        %235 = vmatpush1.msra.mxu0 %v215
        %236 = vmatprep.subr.mxu0 %v218
        %237 = vmatpush1.msra.mxu0 %v217
        %238 = vmatprep.subr.mxu0 %v220
        %239 = vmatpush1.msra.mxu0 %v219
        %240 = vmatprep.subr.mxu0 0.0
        %241 = vmatpush1.msra.mxu0 0.0
        %242 = vmatprep.subr.mxu0 0.0
        %243 = vmatpush1.msra.mxu0 0.0
        %244 = vmatprep.subr.mxu0 0.0
        %245 = vmatpush1.msra.mxu0 0.0
        %246 = vmatprep.subr.mxu0 0.0
        %247 = vmatpush1.msra.mxu0 0.0
        %248 = vmatprep.subr.mxu0 0.0
        %249 = vmatpush1.msra.mxu0 0.0
        %250 = vmatprep.subr.mxu0 0.0
        %251 = vmatpush1.msra.mxu0 0.0
        %252 = vmatprep.subr.mxu0 0.0
        %253 = vmatpush1.msra.mxu0 0.0
        %254 = vmatprep.subr.mxu0 0.0
        %255 = vmatpush1.msra.mxu0 0.0
        %256 = vmatprep.subr.mxu0 0.0
        %257 = vmatpush1.msra.mxu0 0.0
        %258 = vmatprep.subr.mxu0 0.0
        %259 = vmatpush1.msra.mxu0 0.0
        %260 = vmatprep.subr.mxu0 0.0
        %261 = vmatpush1.msra.mxu0 0.0
        %262 = vmatprep.subr.mxu0 0.0
        %263 = vmatpush1.msra.mxu0 0.0
        %264 = vmatprep.subr.mxu0 0.0
        %265 = vmatpush1.msra.mxu0 0.0
        %266 = vmatprep.subr.mxu0 0.0
        %267 = vmatpush1.msra.mxu0 0.0
        %268 = vmatprep.subr.mxu0 0.0
        %269 = vmatpush1.msra.mxu0 0.0
        %270 = vmatprep.subr.mxu0 0.0
        %271 = vmatpush1.msra.mxu0 0.0
        %272 = vmatprep.subr.mxu0 0.0
        %273 = vmatpush1.msra.mxu0 0.0
        %274 = vmatprep.subr.mxu0 0.0
        %275 = vmatpush1.msra.mxu0 0.0
        %276 = vmatprep.subr.mxu0 0.0
        %277 = vmatpush1.msra.mxu0 0.0
        %278 = vmatprep.subr.mxu0 0.0
        %279 = vmatpush1.msra.mxu0 0.0
        %280 = vmatprep.subr.mxu0 0.0
        %281 = vmatpush1.msra.mxu0 0.0
        %282 = vmatprep.subr.mxu0 0.0
        %283 = vmatpush1.msra.mxu0 0.0
        %284 = vmatprep.subr.mxu0 0.0
        %285 = vmatpush1.msra.mxu0 0.0
        %286 = vmatprep.subr.mxu0 0.0
        %287 = vmatpush1.msra.mxu0 0.0
        %288 = vmatprep.mubr.f32.mxu0 0.0
        %289 = vmatmul.mubr.f32.gmra.mrb[0].mxu0 %v222
        %v290 = vpop.f32.mrb[0].mxu0
        %v291 = vadd.f32 0.0, %v290
        %v292 = vpop.f32.mrb[0].mxu0
        %v293 = vadd.f32 0.0, %v292
        %294 = vdwg.mxu0
        %v295 = vmul.f32 %v291, 1.442695
        %v296 = vpow.pop %v295
        %v297 = vmul.f32 %v293, 1.442695
        %v298 = vpow.pop %v297
        %v299 = vadd.f32 %v296, %v298
        %300 = vadd.xlane.f32.xlu0 %v299
        %v301 = vpop.xlane.xlu0 %300
        %v302 = vmax.f32 %v301, 1e-12
        %v303 = vrcp.pop %v302
        %v304 = vmul.f32 %v296, %v303
        %v305 = vmul.f32 %v298, %v303
        %306 = vst [vmem:[%s193] sm:$0xff] %v304
        %307 = vst [vmem:[%s193 + $0x8] sm:$0xff] %v305
        %s308 = sand.u32 %s92, 1
        %s309 = scalar_lea.sflag [#allocation5], %s308
        %s310 = sand.u32 %s92, 1
        %s311 = smul.addr %s310, 16
        %s312 = scalar_lea.vmem [#allocation8], %s311
        // Predicated region
        $region37: #{tpu_custom_call.1} parent=27 // pred_check
          %p313 = pneg %p102
        $region38: #{tpu_custom_call.1} parent=27 // pred_check_branch
          %315 = sbr.rel (%p313) target = $region40
        $region39: #{tpu_custom_call.1} parent=27 // pred_region
          %s317 = ssub.s32 256, 256
          %318 = vsyncadd %s309, %s317
          %s319 = smul.addr %s24, 2
          %s320 = smul.addr %s319, 128
          %s321 = scalar_lea.hbm %s2, %s320
          %s323 = sshll.u32 %s312, 4
          %s324 = int_to_ptr.vmem [resolvable:$true] %s323
          %326 = dma.vmem_to_hbm [thread:$0]  %s324, 256, %s321, %s309
        $region40: #{tpu_custom_call.1} parent=27 // pred_fallthru
          _
      $region28: #{tpu_custom_call.1} parent=5 // pred_fallthru
        _
      %p327 = scmp.le.s32.totalorder 2, %s15
      // Predicated region
      $region41: #{tpu_custom_call.1} parent=5 // pred_check
        %p328 = pneg %p327
      $region42: #{tpu_custom_call.1} parent=5 // pred_check_branch
        %330 = sbr.rel (%p328) target = $region44
      $region43: #{tpu_custom_call.1} parent=5 // pred_region
        %s331 = ssub.s32 %s15, 2
        // Predicated region
        $region45: #{tpu_custom_call.1} parent=43 // pred_check
          %p332 = pneg %p108
        $region46: #{tpu_custom_call.1} parent=43 // pred_check_branch
          %334 = sbr.rel (%p332) target = $region48
        $region47: #{tpu_custom_call.1} parent=43 // pred_region
          %s335 = sand.u32 %s93, 1
          %s336 = scalar_lea.sflag [#allocation5], %s335
          %s337 = sand.u32 %s93, 1
          %s338 = smul.addr %s337, 16
          %s339 = scalar_lea.vmem [#allocation8], %s338
          %340 = dma.done %s336, 256
        $region48: #{tpu_custom_call.1} parent=43 // pred_fallthru
          _
      $region44: #{tpu_custom_call.1} parent=5 // pred_fallthru
        _
    $region6: #{tpu_custom_call.1} parent=1 // loop_footer
      %s19 = sadd.s32 1, %s15
    $region7: #{tpu_custom_call.1} parent=1 // loop_footer_branch
      %14 = sbr.rel target = $region3
    $region8: #{tpu_custom_call.1} parent=1 // loop_exit
      _
    %341 = vsyncpa [#allocation4], 1
    %s342 = scalar_lea.sflag [#allocation4], 1
    %343 = vsyncpa %s342, 1
    %344 = vsyncpa [#allocation7], 1
    %345 = vsyncpa [#allocation5], 1
    %s346 = scalar_lea.sflag [#allocation5], 1
    %347 = vsyncpa %s346, 1

</llo_original>
